<compile_context>
chip_gen: v5e
topology: v5e:2x2
jax: 0.10.0
libtpu: 0.0.40
codegen_flags: <defaults>
</compile_context>

<pallas_src>
import functools

import jax
import jax.numpy as jnp
from jax.experimental import pallas as pl
from jax.experimental.pallas import tpu as pltpu


def _se_kernel(x_ref, w1t_ref, b1_ref, w2t_ref, b2_ref, o_ref, *, inv_hw):
    # x_ref block: (nb, C, HW) — full C and HW, so no layout padding needed.
    x = x_ref[...]

    # --- squeeze: global average pool over the spatial axis.
    if x.dtype == jnp.float32:
        pooled = jnp.sum(x, axis=-1) * inv_hw                        # (nb, C)
    else:
        # Keep x in its native dtype; accumulate in f32 on the MXU via a
        # ones-vector matmul (avoids an (nb, C, HW) f32 temporary in VMEM).
        nb_, c_, hw_ = x.shape
        ones = jnp.ones((hw_, 1), dtype=x.dtype)
        pooled = jnp.dot(x.reshape(nb_ * c_, hw_), ones,
                         preferred_element_type=jnp.float32)
        pooled = pooled.reshape(nb_, c_) * inv_hw                    # (nb, C)

    # --- excite: 1x1 convs as row-major MXU matmuls (BN folded into weights).
    y1 = jnp.dot(pooled, w1t_ref[...], preferred_element_type=jnp.float32)
    y1 = jnp.maximum(y1 + b1_ref[...], 0.0)                          # (nb, C_red)

    y2 = jnp.dot(y1, w2t_ref[...], preferred_element_type=jnp.float32)
    gate = jnp.clip(y2 + b2_ref[...], 0.0, 1.0)                      # hsigmoid (1/6 folded)

    # --- scale input, broadcast gate over the spatial axis.
    o_ref[...] = (x * gate[:, :, None].astype(x.dtype)).astype(o_ref.dtype)


def se_module(x_nchw, w1, scale1, bias1, w2, scale2, bias2, *, nb=None):
    """x_nchw: (N, C, H, W). w1: (C_red, C), w2: (C, C_red). Returns (N, C, H, W)."""
    N, C, H, W = x_nchw.shape
    HW = H * W
    C_red = w1.shape[0]
    dtype = x_nchw.dtype
    itemsize = jnp.dtype(dtype).itemsize

    # Fold BN (eval mode) and the hsigmoid constants into the weights/biases.
    w1t = (scale1[:, None] * w1).astype(jnp.float32).T          # (C, C_red)
    w2t = ((scale2[:, None] / 6.0) * w2).astype(jnp.float32).T  # (C_red, C)
    b1f = bias1.reshape(1, C_red).astype(jnp.float32)
    b2f = ((bias2 + 3.0) / 6.0).reshape(1, C).astype(jnp.float32)

    # No spatial / batch padding: reshape is layout-free; ragged grid handles N.
    x = x_nchw.reshape(N, C, HW)

    # Device-derived block sizing: 2 arrays (in + out) x 2 pipeline buffers of
    # (nb, C, HW) must fit ~45% of VMEM (64 MiB/TC on v7x, 128 MiB on v5e/v6e).
    try:
        vmem_cap = int(pltpu.get_tpu_info().vmem_capacity_bytes)
    except Exception:  # pragma: no cover - conservative fallback (v7x per-TC)
        vmem_cap = 64 * 1024 * 1024
    per_image = C * HW * itemsize
    nb_max = max(1, int(0.45 * vmem_cap) // (4 * per_image))

    if nb is None:
        nb = min(nb_max, N)
        # Keep >= 2 grid steps (>= 4 when there is enough data) so the
        # "parallel" grid axis can feed both of v7x's TensorCores without
        # forcing blocks below a few MiB.
        if N >= 2:
            nb = min(nb, pl.cdiv(N, 2))
        if N >= 4 and N * per_image >= 16 * (1 << 20):
            nb = min(nb, pl.cdiv(N, 4))
    nb = int(max(1, min(nb, N)))

    grid = (pl.cdiv(N, nb),)  # ragged tail block is write-masked by Pallas
    block_bytes = nb * per_image
    vmem_limit = int(min(int(0.9 * vmem_cap),
                         max(16 * 1024 * 1024, 4 * block_bytes + (4 << 20))))

    weight_bytes = 4 * (w1t.size + w2t.size + b1f.size + b2f.size)
    cost = pl.CostEstimate(
        flops=2 * N * C * HW + 2 * N * (C * C_red + C_red * C),
        transcendentals=0,
        bytes_accessed=2 * N * C * HW * itemsize + weight_bytes,
    )

    kernel = functools.partial(_se_kernel, inv_hw=1.0 / HW)
    full = lambda n: (0, 0)

    # NOTE: input_output_aliases={0: 0} would also be legal (each block is fully
    # read before its output block is written) and saves an HBM allocation, but
    # it is left off by default so eager callers keep their input buffer.
    out = pl.pallas_call(
        kernel,
        out_shape=jax.ShapeDtypeStruct((N, C, HW), dtype),
        grid_spec=pltpu.PrefetchScalarGridSpec(
            num_scalar_prefetch=0,
            grid=grid,
            in_specs=[
                pl.BlockSpec((nb, C, HW), lambda n: (n, 0, 0)),  # x
                pl.BlockSpec((C, C_red), full),                  # W1.T (BN1 folded)
                pl.BlockSpec((1, C_red), full),                  # b1
                pl.BlockSpec((C_red, C), full),                  # W2.T (BN2 + 1/6 folded)
                pl.BlockSpec((1, C), full),                      # (b2 + 3) / 6
            ],
            out_specs=pl.BlockSpec((nb, C, HW), lambda n: (n, 0, 0)),
        ),
        compiler_params=pltpu.CompilerParams(
            dimension_semantics=("parallel",),
            vmem_limit_bytes=vmem_limit,
        ),
        cost_estimate=cost,
    )(x, w1t, b1f, w2t, b2f)

    return out.reshape(N, C, H, W)


def _fold_bn(gamma, beta, running_mean, running_var, eps=1e-5):
    scale = gamma / jnp.sqrt(running_var + eps)
    bias = beta - running_mean * scale
    return scale, bias


if __name__ == "__main__":
    key = jax.random.PRNGKey(0)
    N, C, H, W = 2, 8, 16, 16
    reduction = 4
    C_red = C // reduction

    k_x, k_w1, k_w2, k_g1, k_b1, k_g2, k_b2 = jax.random.split(key, 7)

    x = jax.random.normal(k_x, (N, C, H, W), dtype=jnp.float32)

    # Conv2d(in_size, in_size//reduction, k=1, bias=False) -> weight (C_red, C)
    w1 = jax.random.normal(k_w1, (C_red, C), dtype=jnp.float32) * 0.5
    # Conv2d(in_size//reduction, in_size, k=1, bias=False) -> weight (C, C_red)
    w2 = jax.random.normal(k_w2, (C, C_red), dtype=jnp.float32) * 0.5

    # BatchNorm params (eval-mode semantics, deterministic running stats)
    gamma1 = 1.0 + 0.1 * jax.random.normal(k_g1, (C_red,), dtype=jnp.float32)
    beta1 = 0.1 * jax.random.normal(k_b1, (C_red,), dtype=jnp.float32)
    mean1 = jnp.zeros((C_red,), jnp.float32)
    var1 = jnp.ones((C_red,), jnp.float32)

    gamma2 = 1.0 + 0.1 * jax.random.normal(k_g2, (C,), dtype=jnp.float32)
    beta2 = 0.1 * jax.random.normal(k_b2, (C,), dtype=jnp.float32)
    mean2 = jnp.zeros((C,), jnp.float32)
    var2 = jnp.ones((C,), jnp.float32)

    scale1, bias1 = _fold_bn(gamma1, beta1, mean1, var1)
    scale2, bias2 = _fold_bn(gamma2, beta2, mean2, var2)

    out = se_module(x, w1, scale1, bias1, w2, scale2, bias2)
    out = jax.block_until_ready(out)

    # pure-JAX reference check
    pooled = jnp.mean(x, axis=(2, 3))                             # (N, C)
    y1 = jnp.maximum(pooled @ w1.T * scale1 + bias1, 0.0)         # (N, C_red)
    y2 = y1 @ w2.T * scale2 + bias2                               # (N, C)
    gate = jnp.clip(y2 + 3.0, 0.0, 6.0) / 6.0
    ref = x * gate[:, :, None, None]
    assert jnp.allclose(out, ref, atol=1e-4, rtol=1e-4), "mismatch vs reference"

    print("KERNEL_OK")
</pallas_src>

<mosaic_0001>
module attributes {stable_mosaic.version = 11 : i64} {
  func.func @_se_kernel(%arg0: i32, %arg1: memref<1x8x256xf32, #tpu.memory_space<vmem>>, %arg2: memref<8x2xf32, #tpu.memory_space<vmem>>, %arg3: memref<1x2xf32, #tpu.memory_space<vmem>>, %arg4: memref<2x8xf32, #tpu.memory_space<vmem>>, %arg5: memref<1x8xf32, #tpu.memory_space<vmem>>, %arg6: memref<1x8x256xf32, #tpu.memory_space<vmem>>) attributes {dimension_semantics = [#tpu.dimension_semantics<parallel>], iteration_bounds = array<i64: 2>, scalar_prefetch = 0 : i64, scratch_operands = 0 : i64, tpu.core_type = #tpu.core_type<tc>, window_params = [{transform_indices = @transform_0, window_bounds = array<i64: 1, 8, 256>}, {pipeline_mode = #tpu.pipeline_mode<synchronous>, transform_indices = @transform_1, window_bounds = array<i64: 8, 2>}, {pipeline_mode = #tpu.pipeline_mode<synchronous>, transform_indices = @transform_2, window_bounds = array<i64: 1, 2>}, {pipeline_mode = #tpu.pipeline_mode<synchronous>, transform_indices = @transform_3, window_bounds = array<i64: 2, 8>}, {pipeline_mode = #tpu.pipeline_mode<synchronous>, transform_indices = @transform_4, window_bounds = array<i64: 1, 8>}, {transform_indices = @transform_5, window_bounds = array<i64: 1, 8, 256>}]} {
    %c0 = arith.constant 0 : index
    %c0_0 = arith.constant 0 : index
    %c0_1 = arith.constant 0 : index
    %0 = vector.load %arg1[%c0, %c0_0, %c0_1] : memref<1x8x256xf32, #tpu.memory_space<vmem>>, vector<1x8x256xf32>
    %cst = arith.constant dense<0.000000e+00> : vector<1x8xf32>
    %1 = vector.multi_reduction <add>, %0, %cst [2] : vector<1x8x256xf32> to vector<1x8xf32>
    %cst_2 = arith.constant 3.906250e-03 : f32
    %2 = vector.broadcast %cst_2 : f32 to vector<1x8xf32>
    %3 = arith.mulf %1, %2 : vector<1x8xf32>
    %c0_3 = arith.constant 0 : index
    %c0_4 = arith.constant 0 : index
    %4 = vector.load %arg2[%c0_3, %c0_4] : memref<8x2xf32, #tpu.memory_space<vmem>>, vector<8x2xf32>
    %cst_5 = arith.constant dense<0.000000e+00> : vector<1x2xf32>
    %5 = tpu.matmul %3, %4, %cst_5 {dimension_numbers = #tpu.dot_dimension_numbers<[1], [0], [0], [1], [0, 0, 1, 1], [], []>} : vector<1x8xf32>, vector<8x2xf32>, vector<1x2xf32> -> vector<1x2xf32>
    %c0_6 = arith.constant 0 : index
    %c0_7 = arith.constant 0 : index
    %6 = vector.load %arg3[%c0_6, %c0_7] : memref<1x2xf32, #tpu.memory_space<vmem>>, vector<1x2xf32>
    %7 = arith.addf %5, %6 : vector<1x2xf32>
    %cst_8 = arith.constant 0.000000e+00 : f32
    %8 = vector.broadcast %cst_8 : f32 to vector<1x2xf32>
    %9 = arith.maximumf %7, %8 : vector<1x2xf32>
    %c0_9 = arith.constant 0 : index
    %c0_10 = arith.constant 0 : index
    %10 = vector.load %arg4[%c0_9, %c0_10] : memref<2x8xf32, #tpu.memory_space<vmem>>, vector<2x8xf32>
    %cst_11 = arith.constant dense<0.000000e+00> : vector<1x8xf32>
    %11 = tpu.matmul %9, %10, %cst_11 {dimension_numbers = #tpu.dot_dimension_numbers<[1], [0], [0], [1], [0, 0, 1, 1], [], []>} : vector<1x2xf32>, vector<2x8xf32>, vector<1x8xf32> -> vector<1x8xf32>
    %c0_12 = arith.constant 0 : index
    %c0_13 = arith.constant 0 : index
    %12 = vector.load %arg5[%c0_12, %c0_13] : memref<1x8xf32, #tpu.memory_space<vmem>>, vector<1x8xf32>
    %13 = arith.addf %11, %12 : vector<1x8xf32>
    %cst_14 = arith.constant 0.000000e+00 : f32
    %cst_15 = arith.constant 1.000000e+00 : f32
    %14 = vector.broadcast %cst_14 : f32 to vector<1x8xf32>
    %15 = arith.maximumf %14, %13 : vector<1x8xf32>
    %16 = vector.broadcast %cst_15 : f32 to vector<1x8xf32>
    %17 = arith.minimumf %16, %15 : vector<1x8xf32>
    %18 = vector.shape_cast %17 : vector<1x8xf32> to vector<1x8x1xf32>
    %19 = vector.broadcast %18 : vector<1x8x1xf32> to vector<1x8x256xf32>
    %20 = arith.mulf %0, %19 : vector<1x8x256xf32>
    %c0_16 = arith.constant 0 : index
    %c0_17 = arith.constant 0 : index
    %c0_18 = arith.constant 0 : index
    %21 = vector.load %arg6[%c0_16, %c0_17, %c0_18] : memref<1x8x256xf32, #tpu.memory_space<vmem>>, vector<1x8x256xf32>
    tpu.vector_store %arg6[%c0_16, %c0_17, %c0_18], %20 {strides = array<i32>} : memref<1x8x256xf32, #tpu.memory_space<vmem>>, vector<1x8x256xf32>,
    return
  }
  func.func @transform_0(%arg0: i32) -> (i32, i32, i32) {
    %c0_i32 = arith.constant 0 : i32
    %c0_i32_0 = arith.constant 0 : i32
    %c0_i32_1 = arith.constant 0 : i32
    return %arg0, %c0_i32, %c0_i32_0 : i32, i32, i32
  }
  func.func @transform_1(%arg0: i32) -> (i32, i32) {
    %c0_i32 = arith.constant 0 : i32
    %c0_i32_0 = arith.constant 0 : i32
    %c0_i32_1 = arith.constant 0 : i32
    return %c0_i32, %c0_i32_0 : i32, i32
  }
  func.func @transform_2(%arg0: i32) -> (i32, i32) {
    %c0_i32 = arith.constant 0 : i32
    %c0_i32_0 = arith.constant 0 : i32
    %c0_i32_1 = arith.constant 0 : i32
    return %c0_i32, %c0_i32_0 : i32, i32
  }
  func.func @transform_3(%arg0: i32) -> (i32, i32) {
    %c0_i32 = arith.constant 0 : i32
    %c0_i32_0 = arith.constant 0 : i32
    %c0_i32_1 = arith.constant 0 : i32
    return %c0_i32, %c0_i32_0 : i32, i32
  }
  func.func @transform_4(%arg0: i32) -> (i32, i32) {
    %c0_i32 = arith.constant 0 : i32
    %c0_i32_0 = arith.constant 0 : i32
    %c0_i32_1 = arith.constant 0 : i32
    return %c0_i32, %c0_i32_0 : i32, i32
  }
  func.func @transform_5(%arg0: i32) -> (i32, i32, i32) {
    %c0_i32 = arith.constant 0 : i32
    %c0_i32_0 = arith.constant 0 : i32
    %c0_i32_1 = arith.constant 0 : i32
    return %arg0, %c0_i32, %c0_i32_0 : i32, i32, i32
  }
}

</mosaic_0001>

<llo_original>
// kernel: tpu_custom_call.1
$region0: #{tpu_custom_call.1}
  #allocation0 [shape = 'u32[]', space=smem, size = 0x4, offset = 0x4, fixed_abs, tag = 'smem constant byte address 0x4 - core index']
  #allocation1 [shape = 'u32[72,128]{1,0:T(1,128)}', space=vmem, size = 0x9000, scoped, tag = 'internal scratch']
  %s0 = inlined_call_operand.hbm [shape: f32[2,8,256], index: 0, kind: input, shape index: {}]
  %s1 = inlined_call_operand.vmem [shape: f32[8,2], index: 1, kind: input, shape index: {}]
  %s2 = inlined_call_operand.vmem [shape: f32[1,2], index: 2, kind: input, shape index: {}]
  %s3 = inlined_call_operand.vmem [shape: f32[2,8], index: 3, kind: input, shape index: {}]
  %s4 = inlined_call_operand.vmem [shape: f32[1,8], index: 4, kind: input, shape index: {}]
  %s5 = inlined_call_operand.hbm [shape: f32[2,8,256], index: 5, kind: output, shape index: {}]
  %s6 = sld [smem:[#allocation0]]
  $region57: #{tpu_custom_call.1} parent=0
    _
  %s8 = ssub.s32 1, %s6
  %s9 = scalar_select 0, %s8, %s6
  $region1: #{tpu_custom_call.1} parent=0
    #allocation2 [shape = 'u8[16384]{0}', space=vmem, size = 0x4000, scoped, tag = 'input window, operand 0']
    #allocation3 [shape = 's32[2]{0}', space=sflag, size = 0x8, scoped, tag = 'scoped memory for tpu_custom_call.1']
    #allocation4 [shape = 's32[2]{0}', space=sflag, size = 0x8, scoped, tag = 'scoped memory for tpu_custom_call.1']
    #allocation5 [shape = 'u8[16384]{0}', space=vmem, size = 0x4000, scoped, tag = 'output window, operand 0']
    %10 = vsyncpa [#allocation3], 0
    %s11 = scalar_lea.sflag [#allocation3], 1
    %12 = vsyncpa %s11, 0
    %13 = vsyncpa [#allocation4], 0
    %s14 = scalar_lea.sflag [#allocation4], 1
    %15 = vsyncpa %s14, 0
    loop: start=0, step=1, limit=4
    $region2: #{tpu_custom_call.1} parent=1 // loop_pre_header
      _
    $region3: #{tpu_custom_call.1} parent=1 // loop_header
      %s17 = sphi 0, %s21
      %p18 = scmp.ge.s32.totalorder %s17, 4
      %s27 = sphi 0, %s29
      %s30 = sphi 0, %s27
      %s31 = sphi 0, %s30
      %s47 = sphi 0, %s31
      %s51 = sphi 0, %s51
      %s53 = sphi 0, %s51
      %s54 = sphi 0, %s53
      %s68 = sphi 0, %s54
      %s72 = sphi 0, %s72
      %s74 = sphi 0, %s72
      %s75 = sphi 0, %s74
      %s89 = sphi 0, %s75
      %s93 = sphi 0, %s93
      %s95 = sphi 0, %s93
      %s96 = sphi 0, %s95
      %s110 = sphi 0, %s96
      %s114 = sphi 0, %s114
      %s116 = sphi 0, %s114
      %s117 = sphi 0, %s116
      %s131 = sphi 0, %s117
      %s137 = sphi 0, %s139
      %s140 = sphi 0, %s137
      %s141 = sphi 0, %s140
      %s157 = sphi 0, %s141
    $region4: #{tpu_custom_call.1} parent=1 // loop_header_branch
      %20 = sbr.rel (%p18) target = $region8
    $region5: #{tpu_custom_call.1} parent=1 // loop_body
      %s22 = ssub.s32 %s17, 1
      %s23 = ssub.s32 %s17, 2
      %s24 = sadd.s32 %s17, 1
      %s25 = ssub.s32 %s17, %s24
      %p26 = scmp.eq.s32.totalorder %s25, 0
      %s28 = sadd.s32 %s27, 1
      %s29 = scalar_select %p26, %s27, %s28
      %p32 = pneg %p26
      %p33 = scmp.eq.s32.totalorder %s17, 1
      %p34 = por %p32, %p33
      %p35 = scmp.ne.s32.totalorder %s27, %s30
      %p36 = scmp.eq.s32.totalorder %s17, 0
      %p37 = por %p35, %p36
      %p38 = scmp.ne.s32.totalorder %s27, %s30
      %p39 = scmp.eq.s32.totalorder %s22, 1
      %p40 = por %p38, %p39
      %p41 = scmp.ne.s32.totalorder %s30, %s31
      %p42 = scmp.eq.s32.totalorder %s22, 0
      %p43 = por %p41, %p42
      %p44 = scmp.ne.s32.totalorder %s30, %s31
      %p45 = scmp.eq.s32.totalorder %s23, 1
      %p46 = por %p44, %p45
      %p48 = scmp.ne.s32.totalorder %s31, %s47
      %p49 = scmp.eq.s32.totalorder %s23, 0
      %p50 = por %p48, %p49
      %s52 = sadd.s32 %s51, 1
      %p55 = scmp.eq.s32.totalorder %s17, 1
      %p56 = scmp.ne.s32.totalorder %s51, %s53
      %p57 = scmp.eq.s32.totalorder %s17, 0
      %p58 = por %p56, %p57
      %p59 = scmp.ne.s32.totalorder %s51, %s53
      %p60 = scmp.eq.s32.totalorder %s22, 1
      %p61 = por %p59, %p60
      %p62 = scmp.ne.s32.totalorder %s53, %s54
      %p63 = scmp.eq.s32.totalorder %s22, 0
      %p64 = por %p62, %p63
      %p65 = scmp.ne.s32.totalorder %s53, %s54
      %p66 = scmp.eq.s32.totalorder %s23, 1
      %p67 = por %p65, %p66
      %p69 = scmp.ne.s32.totalorder %s54, %s68
      %p70 = scmp.eq.s32.totalorder %s23, 0
      %p71 = por %p69, %p70
      %s73 = sadd.s32 %s72, 1
      %p76 = scmp.eq.s32.totalorder %s17, 1
      %p77 = scmp.ne.s32.totalorder %s72, %s74
      %p78 = scmp.eq.s32.totalorder %s17, 0
      %p79 = por %p77, %p78
      %p80 = scmp.ne.s32.totalorder %s72, %s74
      %p81 = scmp.eq.s32.totalorder %s22, 1
      %p82 = por %p80, %p81
      %p83 = scmp.ne.s32.totalorder %s74, %s75
      %p84 = scmp.eq.s32.totalorder %s22, 0
      %p85 = por %p83, %p84
      %p86 = scmp.ne.s32.totalorder %s74, %s75
      %p87 = scmp.eq.s32.totalorder %s23, 1
      %p88 = por %p86, %p87
      %p90 = scmp.ne.s32.totalorder %s75, %s89
      %p91 = scmp.eq.s32.totalorder %s23, 0
      %p92 = por %p90, %p91
      %s94 = sadd.s32 %s93, 1
      %p97 = scmp.eq.s32.totalorder %s17, 1
      %p98 = scmp.ne.s32.totalorder %s93, %s95
      %p99 = scmp.eq.s32.totalorder %s17, 0
      %p100 = por %p98, %p99
      %p101 = scmp.ne.s32.totalorder %s93, %s95
      %p102 = scmp.eq.s32.totalorder %s22, 1
      %p103 = por %p101, %p102
      %p104 = scmp.ne.s32.totalorder %s95, %s96
      %p105 = scmp.eq.s32.totalorder %s22, 0
      %p106 = por %p104, %p105
      %p107 = scmp.ne.s32.totalorder %s95, %s96
      %p108 = scmp.eq.s32.totalorder %s23, 1
      %p109 = por %p107, %p108
      %p111 = scmp.ne.s32.totalorder %s96, %s110
      %p112 = scmp.eq.s32.totalorder %s23, 0
      %p113 = por %p111, %p112
      %s115 = sadd.s32 %s114, 1
      %p118 = scmp.eq.s32.totalorder %s17, 1
      %p119 = scmp.ne.s32.totalorder %s114, %s116
      %p120 = scmp.eq.s32.totalorder %s17, 0
      %p121 = por %p119, %p120
      %p122 = scmp.ne.s32.totalorder %s114, %s116
      %p123 = scmp.eq.s32.totalorder %s22, 1
      %p124 = por %p122, %p123
      %p125 = scmp.ne.s32.totalorder %s116, %s117
      %p126 = scmp.eq.s32.totalorder %s22, 0
      %p127 = por %p125, %p126
      %p128 = scmp.ne.s32.totalorder %s116, %s117
      %p129 = scmp.eq.s32.totalorder %s23, 1
      %p130 = por %p128, %p129
      %p132 = scmp.ne.s32.totalorder %s117, %s131
      %p133 = scmp.eq.s32.totalorder %s23, 0
      %p134 = por %p132, %p133
      %s135 = ssub.s32 %s17, %s24
      %p136 = scmp.eq.s32.totalorder %s135, 0
      %s138 = sadd.s32 %s137, 1
      %s139 = scalar_select %p136, %s137, %s138
      %p142 = pneg %p136
      %p143 = scmp.eq.s32.totalorder %s17, 1
      %p144 = por %p142, %p143
      %p145 = scmp.ne.s32.totalorder %s137, %s140
      %p146 = scmp.eq.s32.totalorder %s17, 0
      %p147 = por %p145, %p146
      %p148 = scmp.ne.s32.totalorder %s137, %s140
      %p149 = scmp.eq.s32.totalorder %s22, 1
      %p150 = por %p148, %p149
      %p151 = scmp.ne.s32.totalorder %s140, %s141
      %p152 = scmp.eq.s32.totalorder %s22, 0
      %p153 = por %p151, %p152
      %p154 = scmp.ne.s32.totalorder %s140, %s141
      %p155 = scmp.eq.s32.totalorder %s23, 1
      %p156 = por %p154, %p155
      %p158 = scmp.ne.s32.totalorder %s141, %s157
      %p159 = scmp.eq.s32.totalorder %s23, 0
      %p160 = por %p158, %p159
      %p161 = scmp.le.s32.totalorder 1, %s17
      %p162 = scmp.lt.s32.totalorder %s17, 3
      %p163 = pnand %p161, %p162
      %p164 = pneg %p163
      // Predicated region
      $region9: #{tpu_custom_call.1} parent=5 // pred_check
        _
      $region10: #{tpu_custom_call.1} parent=5 // pred_check_branch
        %166 = sbr.rel (%p163) target = $region12
      $region11: #{tpu_custom_call.1} parent=5 // pred_region
        %s167 = ssub.s32 %s17, 1
        // Predicated region
        $region13: #{tpu_custom_call.1} parent=11 // pred_check
          %p168 = pneg %p64
        $region14: #{tpu_custom_call.1} parent=11 // pred_check_branch
          %170 = sbr.rel (%p168) target = $region16
        $region15: #{tpu_custom_call.1} parent=11 // pred_region
          _
        $region16: #{tpu_custom_call.1} parent=11 // pred_fallthru
          _
        // Predicated region
        $region17: #{tpu_custom_call.1} parent=11 // pred_check
          %p171 = pneg %p85
        $region18: #{tpu_custom_call.1} parent=11 // pred_check_branch
          %173 = sbr.rel (%p171) target = $region20
        $region19: #{tpu_custom_call.1} parent=11 // pred_region
          _
        $region20: #{tpu_custom_call.1} parent=11 // pred_fallthru
          _
        // Predicated region
        $region21: #{tpu_custom_call.1} parent=11 // pred_check
          %p174 = pneg %p106
        $region22: #{tpu_custom_call.1} parent=11 // pred_check_branch
          %176 = sbr.rel (%p174) target = $region24
        $region23: #{tpu_custom_call.1} parent=11 // pred_region
          _
        $region24: #{tpu_custom_call.1} parent=11 // pred_fallthru
          _
        // Predicated region
        $region25: #{tpu_custom_call.1} parent=11 // pred_check
          %p177 = pneg %p127
        $region26: #{tpu_custom_call.1} parent=11 // pred_check_branch
          %179 = sbr.rel (%p177) target = $region28
        $region27: #{tpu_custom_call.1} parent=11 // pred_region
          _
        $region28: #{tpu_custom_call.1} parent=11 // pred_fallthru
          _
      $region12: #{tpu_custom_call.1} parent=5 // pred_fallthru
        _
      %p180 = scmp.lt.s32.totalorder %s17, 2
      // Predicated region
      $region29: #{tpu_custom_call.1} parent=5 // pred_check
        %p181 = pneg %p180
      $region30: #{tpu_custom_call.1} parent=5 // pred_check_branch
        %183 = sbr.rel (%p181) target = $region32
      $region31: #{tpu_custom_call.1} parent=5 // pred_region
        // Predicated region
        $region33: #{tpu_custom_call.1} parent=31 // pred_check
          %p184 = pneg %p37
        $region34: #{tpu_custom_call.1} parent=31 // pred_check_branch
          %186 = sbr.rel (%p184) target = $region36
        $region35: #{tpu_custom_call.1} parent=31 // pred_region
          %s187 = sand.u32 %s27, 1
          %s188 = scalar_lea.sflag [#allocation3], %s187
          %s189 = sand.u32 %s27, 1
          %s190 = smul.addr %s189, 16
          %s191 = scalar_lea.vmem [#allocation2], %s190
          %193 = vsyncadd %s188, 0
          %s194 = smul.addr %s17, 2
          %s195 = smul.addr %s194, 8
          %s196 = scalar_lea.hbm %s0, %s195
          %s198 = sshll.u32 %s196, 4
          %s199 = int_to_ptr.hbm [resolvable:$true] %s198
          %s200 = sshll.u32 %s191, 4
          %s201 = int_to_ptr.vmem [resolvable:$true] %s200
          %203 = dma.hbm_to_vmem [thread:$0]  %s199, 256, %s201, %s188
        $region36: #{tpu_custom_call.1} parent=31 // pred_fallthru
          _
      $region32: #{tpu_custom_call.1} parent=5 // pred_fallthru
        _
      %p204 = scmp.le.s32.totalorder 1, %s17
      %p205 = scmp.lt.s32.totalorder %s17, 3
      %p206 = pnand %p204, %p205
      %p207 = pneg %p206
      // Predicated region
      $region37: #{tpu_custom_call.1} parent=5 // pred_check
        _
      $region38: #{tpu_custom_call.1} parent=5 // pred_check_branch
        %209 = sbr.rel (%p206) target = $region40
      $region39: #{tpu_custom_call.1} parent=5 // pred_region
        %s210 = ssub.s32 %s17, 1
        %s211 = sand.u32 %s30, 1
        %s212 = scalar_lea.sflag [#allocation3], %s211
        %s213 = sand.u32 %s30, 1
        %s214 = smul.addr %s213, 16
        %s215 = scalar_lea.vmem [#allocation2], %s214
        // Predicated region
        $region41: #{tpu_custom_call.1} parent=39 // pred_check
          %p216 = pneg %p43
        $region42: #{tpu_custom_call.1} parent=39 // pred_check_branch
          %218 = sbr.rel (%p216) target = $region44
        $region43: #{tpu_custom_call.1} parent=39 // pred_region
          %220 = dma.done %s212, 256
        $region44: #{tpu_custom_call.1} parent=39 // pred_fallthru
          _
        %s221 = sand.u32 %s30, 1
        %s222 = scalar_lea.sflag [#allocation3], %s221
        %s223 = sand.u32 %s30, 1
        %s224 = smul.addr %s223, 16
        %s225 = scalar_lea.vmem [#allocation2], %s224
        %p226 = pneg %p43
        %p227 = pneg %p40
        %p228 = pneg %p64
        %p229 = pneg %p61
        %p230 = pneg %p85
        %p231 = pneg %p82
        %p232 = pneg %p106
        %p233 = pneg %p103
        %p234 = pneg %p127
        %p235 = pneg %p124
        %p236 = pneg %p153
        %p237 = pneg %p150
        %s238 = sand.u32 %s140, 1
        %s239 = scalar_lea.sflag [#allocation4], %s238
        %s240 = sand.u32 %s140, 1
        %s241 = smul.addr %s240, 16
        %s242 = scalar_lea.vmem [#allocation5], %s241
        %v243 = vld [vmem:[%s215] sm:$0xff]
        %v244 = vld [vmem:[%s215 + $0x8] sm:$0xff]
        %v245 = vadd.f32 %v243, %v244
        %246 = vadd.xlane.f32.xlu0 %v245
        %v247 = vpop.xlane.xlu0 %246
        %v248 = vmul.f32 %v247, 0.00390625
        %v249 = vld [vmem:[%s1] sm:$0xff]
        %v250 = vld [vmem:[%s2] sm:$0x1]
        %v252 = vlaneseq
        %v253 = vand.u32 %v252, 127
        %v254 = vperm.slane %v248, %v253
        %vm255 = vcmask 64512
        %v256 = vsel %vm255, %v254, 0
        %258 = vmatpush.msra.mxu0 0.0
        %259 = vmatpush.msra.mxu0 0.0
        %260 = vmatpush.msra.mxu0 0.0
        %261 = vmatpush.msra.mxu0 0.0
        %262 = vmatpush.msra.mxu0 0.0
        %263 = vmatpush.msra.mxu0 0.0
        %264 = vmatpush.msra.mxu0 0.0
        %265 = vmatpush.msra.mxu0 0.0
        %266 = vmatpush.msra.mxu0 0.0
        %267 = vmatpush.msra.mxu0 0.0
        %268 = vmatpush.msra.mxu0 0.0
        %269 = vmatpush.msra.mxu0 0.0
        %270 = vmatpush.msra.mxu0 0.0
        %271 = vmatpush.msra.mxu0 0.0
        %272 = vmatpush.msra.mxu0 0.0
        %273 = vmatpush.msra.mxu0 %v249
        %274 = vmatmul.f32.gmra.mxu0 %v256
        %v275 = vpop.f32.mrf.mxu0
        %v276 = vadd.f32 %v250, %v275
        %277 = vdwg.mxu0
        %v278 = vmax.f32 %v276, 0.0
        %v279 = vld [vmem:[%s3] sm:$0x3]
        %v280 = vld [vmem:[%s4] sm:$0x1]
        %vm281 = vcmask 15360
        %v283 = vsel %vm281, %v278, 0
        %vm285 = vcmask 1041408
        %v287 = vsel %vm285, %v279, 0
        %289 = vmatpush.msra.mxu0 0.0
        %290 = vmatpush.msra.mxu0 0.0
        %291 = vmatpush.msra.mxu0 0.0
        %292 = vmatpush.msra.mxu0 0.0
        %293 = vmatpush.msra.mxu0 0.0
        %294 = vmatpush.msra.mxu0 0.0
        %295 = vmatpush.msra.mxu0 0.0
        %296 = vmatpush.msra.mxu0 0.0
        %297 = vmatpush.msra.mxu0 0.0
        %298 = vmatpush.msra.mxu0 0.0
        %299 = vmatpush.msra.mxu0 0.0
        %300 = vmatpush.msra.mxu0 0.0
        %301 = vmatpush.msra.mxu0 0.0
        %302 = vmatpush.msra.mxu0 0.0
        %303 = vmatpush.msra.mxu0 0.0
        %304 = vmatpush.msra.mxu0 %v287
        %305 = vmatmul.f32.gmra.mxu0 %v283
        %v306 = vpop.f32.mrf.mxu0
        %v307 = vadd.f32 %v280, %v306
        %308 = vdwg.mxu0
        %v309 = vmax.f32 %v307, 0.0
        %v310 = vmin.f32 %v309, 1.0
        %v311 = vperm.slane %v310, 0
        %v312 = vlaneseq
        %v313 = vshrl.u32 %v312, 7
        %315 = vset.pattern.permute.xlu0 %v313
        %316 = vperm.xlu0 %315, %v311
        %v317 = vpop.permute.xlu0 %316
        %v318 = vmul.f32 %v243, %v317
        %v319 = vmul.f32 %v244, %v317
        %320 = vst [vmem:[%s242] sm:$0xff] %v318
        %321 = vst [vmem:[%s242 + $0x8] sm:$0xff] %v319
        %s322 = sand.u32 %s140, 1
        %s323 = scalar_lea.sflag [#allocation4], %s322
        %s324 = sand.u32 %s140, 1
        %s325 = smul.addr %s324, 16
        %s326 = scalar_lea.vmem [#allocation5], %s325
        // Predicated region
        $region45: #{tpu_custom_call.1} parent=39 // pred_check
          %p327 = pneg %p150
        $region46: #{tpu_custom_call.1} parent=39 // pred_check_branch
          %329 = sbr.rel (%p327) target = $region48
        $region47: #{tpu_custom_call.1} parent=39 // pred_region
          %331 = vsyncadd %s323, 0
          %s332 = smul.addr %s22, 2
          %s333 = smul.addr %s332, 8
          %s334 = scalar_lea.hbm %s5, %s333
          %s336 = sshll.u32 %s326, 4
          %s337 = int_to_ptr.vmem [resolvable:$true] %s336
          %s338 = sshll.u32 %s334, 4
          %s339 = int_to_ptr.hbm [resolvable:$true] %s338
          %341 = dma.vmem_to_hbm [thread:$0]  %s337, 256, %s339, %s323
        $region48: #{tpu_custom_call.1} parent=39 // pred_fallthru
          _
      $region40: #{tpu_custom_call.1} parent=5 // pred_fallthru
        _
      %p342 = scmp.le.s32.totalorder 2, %s17
      // Predicated region
      $region49: #{tpu_custom_call.1} parent=5 // pred_check
        %p343 = pneg %p342
      $region50: #{tpu_custom_call.1} parent=5 // pred_check_branch
        %345 = sbr.rel (%p343) target = $region52
      $region51: #{tpu_custom_call.1} parent=5 // pred_region
        %s346 = ssub.s32 %s17, 2
        // Predicated region
        $region53: #{tpu_custom_call.1} parent=51 // pred_check
          %p347 = pneg %p156
        $region54: #{tpu_custom_call.1} parent=51 // pred_check_branch
          %349 = sbr.rel (%p347) target = $region56
        $region55: #{tpu_custom_call.1} parent=51 // pred_region
          %s350 = sand.u32 %s141, 1
          %s351 = scalar_lea.sflag [#allocation4], %s350
          %s352 = sand.u32 %s141, 1
          %s353 = smul.addr %s352, 16
          %s354 = scalar_lea.vmem [#allocation5], %s353
          %356 = dma.done %s351, 256
        $region56: #{tpu_custom_call.1} parent=51 // pred_fallthru
          _
      $region52: #{tpu_custom_call.1} parent=5 // pred_fallthru
        _
    $region6: #{tpu_custom_call.1} parent=1 // loop_footer
      %s21 = sadd.s32 1, %s17
    $region7: #{tpu_custom_call.1} parent=1 // loop_footer_branch
      %16 = sbr.rel target = $region3
    $region8: #{tpu_custom_call.1} parent=1 // loop_exit
      _
    %357 = vsyncpa [#allocation3], 1
    %s358 = scalar_lea.sflag [#allocation3], 1
    %359 = vsyncpa %s358, 1
    %360 = vsyncpa [#allocation4], 1
    %s361 = scalar_lea.sflag [#allocation4], 1
    %362 = vsyncpa %s361, 1

</llo_original>
